<compile_context>
chip_gen: v7x
topology: tpu7x:2x2x1
jax: 0.10.0
libtpu: 0.0.40
codegen_flags: <defaults>
</compile_context>

<pallas_src>
import jax
import jax.numpy as jnp
from jax.experimental import pallas as pl
from jax.experimental.pallas import tpu as pltpu

BLOCK_ROWS = 8  # rows gathered per grid step (one f32 sublane tile of output)


def road_encoder_kernel(ids_ref, table_hbm, out_ref, copy_sems):
    # ids_ref   : (N_pad,) int32 in SMEM (scalar prefetch).
    # table_hbm : (num_roads, num_feature) ref left in HBM (pl.ANY).
    # out_ref   : (BLOCK_ROWS, num_feature) output block in VMEM.
    # copy_sems : (BLOCK_ROWS,) DMA semaphores.
    base = pl.program_id(0) * BLOCK_ROWS

    # Read all row ids first (SMEM scalar loads), build the copy descriptors,
    # then start every DMA before waiting on any -> all BLOCK_ROWS row
    # fetches are in flight simultaneously and their latency overlaps.
    copies = []
    for j in range(BLOCK_ROWS):
        row = ids_ref[base + j]
        copies.append(
            pltpu.make_async_copy(
                table_hbm.at[pl.ds(row, 1), :],   # one table row in HBM
                out_ref.at[pl.ds(j, 1), :],       # straight into the out block
                copy_sems.at[j],
            )
        )
    for c in copies:
        c.start()
    for c in copies:
        c.wait()
    # No vector compute at all: the gather is pure DMA; the pipeline writes
    # the filled (BLOCK_ROWS, num_feature) block back to HBM after the body.


def road_encoder(road_ids: jax.Array, table: jax.Array) -> jax.Array:
    """road_ids: (N,) int; table: (num_roads, num_feature) -> (N, num_feature)."""
    n = road_ids.shape[0]
    num_roads, num_feature = table.shape

    # Pad N up to a multiple of BLOCK_ROWS so every output block is full.
    num_blocks = pl.cdiv(n, BLOCK_ROWS)
    n_pad = num_blocks * BLOCK_ROWS

    # Clamp so bad ids cannot cause an OOB table-row DMA (PyTorch raises;
    # here we clamp).
    ids = jnp.clip(road_ids.astype(jnp.int32), 0, num_roads - 1)
    if n_pad != n:
        ids = jnp.pad(ids, (0, n_pad - n))     # padded rows fetch row 0, sliced off

    cost = pl.CostEstimate(
        flops=0,
        transcendentals=0,
        bytes_accessed=n_pad * num_feature * table.dtype.itemsize * 2 + n_pad * 4,
    )

    out = pl.pallas_call(
        road_encoder_kernel,
        out_shape=jax.ShapeDtypeStruct((n_pad, num_feature), table.dtype),
        grid_spec=pltpu.PrefetchScalarGridSpec(
            num_scalar_prefetch=1,
            grid=(num_blocks,),
            in_specs=[
                pl.BlockSpec(memory_space=pl.ANY),   # table stays in HBM
            ],
            out_specs=pl.BlockSpec(
                (BLOCK_ROWS, num_feature), lambda b, ids_ref: (b, 0)
            ),
            scratch_shapes=[pltpu.SemaphoreType.DMA((BLOCK_ROWS,))],
        ),
        compiler_params=pltpu.CompilerParams(
            dimension_semantics=("parallel",),   # independent blocks -> megacore OK
        ),
        cost_estimate=cost,
    )(ids, table)

    # TODO(synk): for very hot paths, fuse this lookup into the consumer kernel
    # so the gathered rows never round-trip through HBM.
    return out[:n] if n_pad != n else out


if __name__ == "__main__":
    # Small, deterministic synthetic setup (no checkpoint loading).
    num_roads = 16      # vocabulary size of the embedding
    num_feature = 32    # embedding dimension
    n_ids = 8           # number of road ids looked up

    key = jax.random.PRNGKey(0)
    k_table, k_ids, k_ids2 = jax.random.split(key, 3)

    # nn.Embedding default init: weight ~ N(0, 1)
    table = jax.random.normal(k_table, (num_roads, num_feature), dtype=jnp.float32)
    road_ids = jax.random.randint(k_ids, (n_ids,), 0, num_roads, dtype=jnp.int32)

    out = jax.block_until_ready(road_encoder(road_ids, table))

    # Correctness check against the plain-JAX reference (torch: embedding(ids)).
    ref = jnp.take(table, road_ids, axis=0)
    assert out.shape == (n_ids, num_feature)
    assert jnp.allclose(out, ref, atol=1e-6, rtol=1e-6), "mismatch vs reference"

    # Also exercise the N-not-multiple-of-BLOCK_ROWS (padding) path.
    road_ids2 = jax.random.randint(k_ids2, (5,), 0, num_roads, dtype=jnp.int32)
    out2 = jax.block_until_ready(road_encoder(road_ids2, table))
    ref2 = jnp.take(table, road_ids2, axis=0)
    assert out2.shape == (5, num_feature)
    assert jnp.allclose(out2, ref2, atol=1e-6, rtol=1e-6), "mismatch (padded path)"

    print("KERNEL_OK")
</pallas_src>

<mosaic_0001>
module attributes {stable_mosaic.version = 11 : i64} {
  func.func @road_encoder_kernel(%arg0: i32, %arg1: memref<8xi32, #tpu.memory_space<smem>>, %arg2: memref<16x32xf32, #tpu.memory_space<any>>, %arg3: memref<8x32xf32, #tpu.memory_space<vmem>>, %arg4: memref<8x!tpu.dma_semaphore, #tpu.memory_space<semaphore_mem>>) attributes {dimension_semantics = [#tpu.dimension_semantics<parallel>], iteration_bounds = array<i64: 1>, scalar_prefetch = 1 : i64, scratch_operands = 1 : i64, tpu.core_type = #tpu.core_type<tc>, window_params = [{}, {transform_indices = @transform_1, window_bounds = array<i64: 8, 32>}]} {
    %c8_i32 = arith.constant 8 : i32
    %0 = arith.muli %arg0, %c8_i32 : i32
    %c0_i32 = arith.constant 0 : i32
    %1 = arith.addi %0, %c0_i32 : i32
    %2 = arith.index_cast %1 : i32 to index
    %3 = memref.load %arg1[%2] : memref<8xi32, #tpu.memory_space<smem>>
    %c1_i32 = arith.constant 1 : i32
    %4 = arith.addi %0, %c1_i32 : i32
    %5 = arith.index_cast %4 : i32 to index
    %6 = memref.load %arg1[%5] : memref<8xi32, #tpu.memory_space<smem>>
    %c2_i32 = arith.constant 2 : i32
    %7 = arith.addi %0, %c2_i32 : i32
    %8 = arith.index_cast %7 : i32 to index
    %9 = memref.load %arg1[%8] : memref<8xi32, #tpu.memory_space<smem>>
    %c3_i32 = arith.constant 3 : i32
    %10 = arith.addi %0, %c3_i32 : i32
    %11 = arith.index_cast %10 : i32 to index
    %12 = memref.load %arg1[%11] : memref<8xi32, #tpu.memory_space<smem>>
    %c4_i32 = arith.constant 4 : i32
    %13 = arith.addi %0, %c4_i32 : i32
    %14 = arith.index_cast %13 : i32 to index
    %15 = memref.load %arg1[%14] : memref<8xi32, #tpu.memory_space<smem>>
    %c5_i32 = arith.constant 5 : i32
    %16 = arith.addi %0, %c5_i32 : i32
    %17 = arith.index_cast %16 : i32 to index
    %18 = memref.load %arg1[%17] : memref<8xi32, #tpu.memory_space<smem>>
    %c6_i32 = arith.constant 6 : i32
    %19 = arith.addi %0, %c6_i32 : i32
    %20 = arith.index_cast %19 : i32 to index
    %21 = memref.load %arg1[%20] : memref<8xi32, #tpu.memory_space<smem>>
    %c7_i32 = arith.constant 7 : i32
    %22 = arith.addi %0, %c7_i32 : i32
    %23 = arith.index_cast %22 : i32 to index
    %24 = memref.load %arg1[%23] : memref<8xi32, #tpu.memory_space<smem>>
    %c0_i32_0 = arith.constant 0 : i32
    %c0_i32_1 = arith.constant 0 : i32
    %25 = tpu.memref_slice %arg2[%3, %c0_i32_1] : memref<16x32xf32, #tpu.memory_space<any>> -> memref<1x32xf32, #tpu.memory_space<any>>
    %c0_i32_2 = arith.constant 0 : i32
    %c0_i32_3 = arith.constant 0 : i32
    %26 = tpu.memref_slice %arg3[%c0_i32_2, %c0_i32_3] : memref<8x32xf32, #tpu.memory_space<vmem>> -> memref<1x32xf32, #tpu.memory_space<vmem>>
    %27 = tpu.memref_slice %arg4[%c0_i32_0] : memref<8x!tpu.dma_semaphore, #tpu.memory_space<semaphore_mem>> -> memref<1x!tpu.dma_semaphore, #tpu.memory_space<semaphore_mem>>
    %28 = tpu.memref_squeeze %27 : memref<1x!tpu.dma_semaphore, #tpu.memory_space<semaphore_mem>> -> memref<!tpu.dma_semaphore, #tpu.memory_space<semaphore_mem>>
    tpu.enqueue_dma source(%25 : memref<1x32xf32, #tpu.memory_space<any>>) target(%26 : memref<1x32xf32, #tpu.memory_space<vmem>>) target_semaphore(%28 : memref<!tpu.dma_semaphore, #tpu.memory_space<semaphore_mem>>)
    %c1_i32_4 = arith.constant 1 : i32
    %c0_i32_5 = arith.constant 0 : i32
    %29 = tpu.memref_slice %arg2[%6, %c0_i32_5] : memref<16x32xf32, #tpu.memory_space<any>> -> memref<1x32xf32, #tpu.memory_space<any>>
    %c1_i32_6 = arith.constant 1 : i32
    %c0_i32_7 = arith.constant 0 : i32
    %30 = tpu.memref_slice %arg3[%c1_i32_6, %c0_i32_7] : memref<8x32xf32, #tpu.memory_space<vmem>> -> memref<1x32xf32, #tpu.memory_space<vmem>>
    %31 = tpu.memref_slice %arg4[%c1_i32_4] : memref<8x!tpu.dma_semaphore, #tpu.memory_space<semaphore_mem>> -> memref<1x!tpu.dma_semaphore, #tpu.memory_space<semaphore_mem>>
    %32 = tpu.memref_squeeze %31 : memref<1x!tpu.dma_semaphore, #tpu.memory_space<semaphore_mem>> -> memref<!tpu.dma_semaphore, #tpu.memory_space<semaphore_mem>>
    tpu.enqueue_dma source(%29 : memref<1x32xf32, #tpu.memory_space<any>>) target(%30 : memref<1x32xf32, #tpu.memory_space<vmem>>) target_semaphore(%32 : memref<!tpu.dma_semaphore, #tpu.memory_space<semaphore_mem>>)
    %c2_i32_8 = arith.constant 2 : i32
    %c0_i32_9 = arith.constant 0 : i32
    %33 = tpu.memref_slice %arg2[%9, %c0_i32_9] : memref<16x32xf32, #tpu.memory_space<any>> -> memref<1x32xf32, #tpu.memory_space<any>>
    %c2_i32_10 = arith.constant 2 : i32
    %c0_i32_11 = arith.constant 0 : i32
    %34 = tpu.memref_slice %arg3[%c2_i32_10, %c0_i32_11] : memref<8x32xf32, #tpu.memory_space<vmem>> -> memref<1x32xf32, #tpu.memory_space<vmem>>
    %35 = tpu.memref_slice %arg4[%c2_i32_8] : memref<8x!tpu.dma_semaphore, #tpu.memory_space<semaphore_mem>> -> memref<1x!tpu.dma_semaphore, #tpu.memory_space<semaphore_mem>>
    %36 = tpu.memref_squeeze %35 : memref<1x!tpu.dma_semaphore, #tpu.memory_space<semaphore_mem>> -> memref<!tpu.dma_semaphore, #tpu.memory_space<semaphore_mem>>
    tpu.enqueue_dma source(%33 : memref<1x32xf32, #tpu.memory_space<any>>) target(%34 : memref<1x32xf32, #tpu.memory_space<vmem>>) target_semaphore(%36 : memref<!tpu.dma_semaphore, #tpu.memory_space<semaphore_mem>>)
    %c3_i32_12 = arith.constant 3 : i32
    %c0_i32_13 = arith.constant 0 : i32
    %37 = tpu.memref_slice %arg2[%12, %c0_i32_13] : memref<16x32xf32, #tpu.memory_space<any>> -> memref<1x32xf32, #tpu.memory_space<any>>
    %c3_i32_14 = arith.constant 3 : i32
    %c0_i32_15 = arith.constant 0 : i32
    %38 = tpu.memref_slice %arg3[%c3_i32_14, %c0_i32_15] : memref<8x32xf32, #tpu.memory_space<vmem>> -> memref<1x32xf32, #tpu.memory_space<vmem>>
    %39 = tpu.memref_slice %arg4[%c3_i32_12] : memref<8x!tpu.dma_semaphore, #tpu.memory_space<semaphore_mem>> -> memref<1x!tpu.dma_semaphore, #tpu.memory_space<semaphore_mem>>
    %40 = tpu.memref_squeeze %39 : memref<1x!tpu.dma_semaphore, #tpu.memory_space<semaphore_mem>> -> memref<!tpu.dma_semaphore, #tpu.memory_space<semaphore_mem>>
    tpu.enqueue_dma source(%37 : memref<1x32xf32, #tpu.memory_space<any>>) target(%38 : memref<1x32xf32, #tpu.memory_space<vmem>>) target_semaphore(%40 : memref<!tpu.dma_semaphore, #tpu.memory_space<semaphore_mem>>)
    %c4_i32_16 = arith.constant 4 : i32
    %c0_i32_17 = arith.constant 0 : i32
    %41 = tpu.memref_slice %arg2[%15, %c0_i32_17] : memref<16x32xf32, #tpu.memory_space<any>> -> memref<1x32xf32, #tpu.memory_space<any>>
    %c4_i32_18 = arith.constant 4 : i32
    %c0_i32_19 = arith.constant 0 : i32
    %42 = tpu.memref_slice %arg3[%c4_i32_18, %c0_i32_19] : memref<8x32xf32, #tpu.memory_space<vmem>> -> memref<1x32xf32, #tpu.memory_space<vmem>>
    %43 = tpu.memref_slice %arg4[%c4_i32_16] : memref<8x!tpu.dma_semaphore, #tpu.memory_space<semaphore_mem>> -> memref<1x!tpu.dma_semaphore, #tpu.memory_space<semaphore_mem>>
    %44 = tpu.memref_squeeze %43 : memref<1x!tpu.dma_semaphore, #tpu.memory_space<semaphore_mem>> -> memref<!tpu.dma_semaphore, #tpu.memory_space<semaphore_mem>>
    tpu.enqueue_dma source(%41 : memref<1x32xf32, #tpu.memory_space<any>>) target(%42 : memref<1x32xf32, #tpu.memory_space<vmem>>) target_semaphore(%44 : memref<!tpu.dma_semaphore, #tpu.memory_space<semaphore_mem>>)
    %c5_i32_20 = arith.constant 5 : i32
    %c0_i32_21 = arith.constant 0 : i32
    %45 = tpu.memref_slice %arg2[%18, %c0_i32_21] : memref<16x32xf32, #tpu.memory_space<any>> -> memref<1x32xf32, #tpu.memory_space<any>>
    %c5_i32_22 = arith.constant 5 : i32
    %c0_i32_23 = arith.constant 0 : i32
    %46 = tpu.memref_slice %arg3[%c5_i32_22, %c0_i32_23] : memref<8x32xf32, #tpu.memory_space<vmem>> -> memref<1x32xf32, #tpu.memory_space<vmem>>
    %47 = tpu.memref_slice %arg4[%c5_i32_20] : memref<8x!tpu.dma_semaphore, #tpu.memory_space<semaphore_mem>> -> memref<1x!tpu.dma_semaphore, #tpu.memory_space<semaphore_mem>>
    %48 = tpu.memref_squeeze %47 : memref<1x!tpu.dma_semaphore, #tpu.memory_space<semaphore_mem>> -> memref<!tpu.dma_semaphore, #tpu.memory_space<semaphore_mem>>
    tpu.enqueue_dma source(%45 : memref<1x32xf32, #tpu.memory_space<any>>) target(%46 : memref<1x32xf32, #tpu.memory_space<vmem>>) target_semaphore(%48 : memref<!tpu.dma_semaphore, #tpu.memory_space<semaphore_mem>>)
    %c6_i32_24 = arith.constant 6 : i32
    %c0_i32_25 = arith.constant 0 : i32
    %49 = tpu.memref_slice %arg2[%21, %c0_i32_25] : memref<16x32xf32, #tpu.memory_space<any>> -> memref<1x32xf32, #tpu.memory_space<any>>
    %c6_i32_26 = arith.constant 6 : i32
    %c0_i32_27 = arith.constant 0 : i32
    %50 = tpu.memref_slice %arg3[%c6_i32_26, %c0_i32_27] : memref<8x32xf32, #tpu.memory_space<vmem>> -> memref<1x32xf32, #tpu.memory_space<vmem>>
    %51 = tpu.memref_slice %arg4[%c6_i32_24] : memref<8x!tpu.dma_semaphore, #tpu.memory_space<semaphore_mem>> -> memref<1x!tpu.dma_semaphore, #tpu.memory_space<semaphore_mem>>
    %52 = tpu.memref_squeeze %51 : memref<1x!tpu.dma_semaphore, #tpu.memory_space<semaphore_mem>> -> memref<!tpu.dma_semaphore, #tpu.memory_space<semaphore_mem>>
    tpu.enqueue_dma source(%49 : memref<1x32xf32, #tpu.memory_space<any>>) target(%50 : memref<1x32xf32, #tpu.memory_space<vmem>>) target_semaphore(%52 : memref<!tpu.dma_semaphore, #tpu.memory_space<semaphore_mem>>)
    %c7_i32_28 = arith.constant 7 : i32
    %c0_i32_29 = arith.constant 0 : i32
    %53 = tpu.memref_slice %arg2[%24, %c0_i32_29] : memref<16x32xf32, #tpu.memory_space<any>> -> memref<1x32xf32, #tpu.memory_space<any>>
    %c7_i32_30 = arith.constant 7 : i32
    %c0_i32_31 = arith.constant 0 : i32
    %54 = tpu.memref_slice %arg3[%c7_i32_30, %c0_i32_31] : memref<8x32xf32, #tpu.memory_space<vmem>> -> memref<1x32xf32, #tpu.memory_space<vmem>>
    %55 = tpu.memref_slice %arg4[%c7_i32_28] : memref<8x!tpu.dma_semaphore, #tpu.memory_space<semaphore_mem>> -> memref<1x!tpu.dma_semaphore, #tpu.memory_space<semaphore_mem>>
    %56 = tpu.memref_squeeze %55 : memref<1x!tpu.dma_semaphore, #tpu.memory_space<semaphore_mem>> -> memref<!tpu.dma_semaphore, #tpu.memory_space<semaphore_mem>>
    tpu.enqueue_dma source(%53 : memref<1x32xf32, #tpu.memory_space<any>>) target(%54 : memref<1x32xf32, #tpu.memory_space<vmem>>) target_semaphore(%56 : memref<!tpu.dma_semaphore, #tpu.memory_space<semaphore_mem>>)
    %c0_i32_32 = arith.constant 0 : i32
    %c0_i32_33 = arith.constant 0 : i32
    %57 = tpu.memref_slice %arg2[%3, %c0_i32_33] : memref<16x32xf32, #tpu.memory_space<any>> -> memref<1x32xf32, #tpu.memory_space<any>>
    %c0_i32_34 = arith.constant 0 : i32
    %c0_i32_35 = arith.constant 0 : i32
    %58 = tpu.memref_slice %arg3[%c0_i32_34, %c0_i32_35] : memref<8x32xf32, #tpu.memory_space<vmem>> -> memref<1x32xf32, #tpu.memory_space<vmem>>
    %59 = tpu.memref_slice %arg4[%c0_i32_32] : memref<8x!tpu.dma_semaphore, #tpu.memory_space<semaphore_mem>> -> memref<1x!tpu.dma_semaphore, #tpu.memory_space<semaphore_mem>>
    %60 = tpu.memref_squeeze %59 : memref<1x!tpu.dma_semaphore, #tpu.memory_space<semaphore_mem>> -> memref<!tpu.dma_semaphore, #tpu.memory_space<semaphore_mem>>
    tpu.wait_dma2 semaphore(%60 : memref<!tpu.dma_semaphore, #tpu.memory_space<semaphore_mem>>) src(%57 : memref<1x32xf32, #tpu.memory_space<any>>) dst(%58 : memref<1x32xf32, #tpu.memory_space<vmem>>)
    %c1_i32_36 = arith.constant 1 : i32
    %c0_i32_37 = arith.constant 0 : i32
    %61 = tpu.memref_slice %arg2[%6, %c0_i32_37] : memref<16x32xf32, #tpu.memory_space<any>> -> memref<1x32xf32, #tpu.memory_space<any>>
    %c1_i32_38 = arith.constant 1 : i32
    %c0_i32_39 = arith.constant 0 : i32
    %62 = tpu.memref_slice %arg3[%c1_i32_38, %c0_i32_39] : memref<8x32xf32, #tpu.memory_space<vmem>> -> memref<1x32xf32, #tpu.memory_space<vmem>>
    %63 = tpu.memref_slice %arg4[%c1_i32_36] : memref<8x!tpu.dma_semaphore, #tpu.memory_space<semaphore_mem>> -> memref<1x!tpu.dma_semaphore, #tpu.memory_space<semaphore_mem>>
    %64 = tpu.memref_squeeze %63 : memref<1x!tpu.dma_semaphore, #tpu.memory_space<semaphore_mem>> -> memref<!tpu.dma_semaphore, #tpu.memory_space<semaphore_mem>>
    tpu.wait_dma2 semaphore(%64 : memref<!tpu.dma_semaphore, #tpu.memory_space<semaphore_mem>>) src(%61 : memref<1x32xf32, #tpu.memory_space<any>>) dst(%62 : memref<1x32xf32, #tpu.memory_space<vmem>>)
    %c2_i32_40 = arith.constant 2 : i32
    %c0_i32_41 = arith.constant 0 : i32
    %65 = tpu.memref_slice %arg2[%9, %c0_i32_41] : memref<16x32xf32, #tpu.memory_space<any>> -> memref<1x32xf32, #tpu.memory_space<any>>
    %c2_i32_42 = arith.constant 2 : i32
    %c0_i32_43 = arith.constant 0 : i32
    %66 = tpu.memref_slice %arg3[%c2_i32_42, %c0_i32_43] : memref<8x32xf32, #tpu.memory_space<vmem>> -> memref<1x32xf32, #tpu.memory_space<vmem>>
    %67 = tpu.memref_slice %arg4[%c2_i32_40] : memref<8x!tpu.dma_semaphore, #tpu.memory_space<semaphore_mem>> -> memref<1x!tpu.dma_semaphore, #tpu.memory_space<semaphore_mem>>
    %68 = tpu.memref_squeeze %67 : memref<1x!tpu.dma_semaphore, #tpu.memory_space<semaphore_mem>> -> memref<!tpu.dma_semaphore, #tpu.memory_space<semaphore_mem>>
    tpu.wait_dma2 semaphore(%68 : memref<!tpu.dma_semaphore, #tpu.memory_space<semaphore_mem>>) src(%65 : memref<1x32xf32, #tpu.memory_space<any>>) dst(%66 : memref<1x32xf32, #tpu.memory_space<vmem>>)
    %c3_i32_44 = arith.constant 3 : i32
    %c0_i32_45 = arith.constant 0 : i32
    %69 = tpu.memref_slice %arg2[%12, %c0_i32_45] : memref<16x32xf32, #tpu.memory_space<any>> -> memref<1x32xf32, #tpu.memory_space<any>>
    %c3_i32_46 = arith.constant 3 : i32
    %c0_i32_47 = arith.constant 0 : i32
    %70 = tpu.memref_slice %arg3[%c3_i32_46, %c0_i32_47] : memref<8x32xf32, #tpu.memory_space<vmem>> -> memref<1x32xf32, #tpu.memory_space<vmem>>
    %71 = tpu.memref_slice %arg4[%c3_i32_44] : memref<8x!tpu.dma_semaphore, #tpu.memory_space<semaphore_mem>> -> memref<1x!tpu.dma_semaphore, #tpu.memory_space<semaphore_mem>>
    %72 = tpu.memref_squeeze %71 : memref<1x!tpu.dma_semaphore, #tpu.memory_space<semaphore_mem>> -> memref<!tpu.dma_semaphore, #tpu.memory_space<semaphore_mem>>
    tpu.wait_dma2 semaphore(%72 : memref<!tpu.dma_semaphore, #tpu.memory_space<semaphore_mem>>) src(%69 : memref<1x32xf32, #tpu.memory_space<any>>) dst(%70 : memref<1x32xf32, #tpu.memory_space<vmem>>)
    %c4_i32_48 = arith.constant 4 : i32
    %c0_i32_49 = arith.constant 0 : i32
    %73 = tpu.memref_slice %arg2[%15, %c0_i32_49] : memref<16x32xf32, #tpu.memory_space<any>> -> memref<1x32xf32, #tpu.memory_space<any>>
    %c4_i32_50 = arith.constant 4 : i32
    %c0_i32_51 = arith.constant 0 : i32
    %74 = tpu.memref_slice %arg3[%c4_i32_50, %c0_i32_51] : memref<8x32xf32, #tpu.memory_space<vmem>> -> memref<1x32xf32, #tpu.memory_space<vmem>>
    %75 = tpu.memref_slice %arg4[%c4_i32_48] : memref<8x!tpu.dma_semaphore, #tpu.memory_space<semaphore_mem>> -> memref<1x!tpu.dma_semaphore, #tpu.memory_space<semaphore_mem>>
    %76 = tpu.memref_squeeze %75 : memref<1x!tpu.dma_semaphore, #tpu.memory_space<semaphore_mem>> -> memref<!tpu.dma_semaphore, #tpu.memory_space<semaphore_mem>>
    tpu.wait_dma2 semaphore(%76 : memref<!tpu.dma_semaphore, #tpu.memory_space<semaphore_mem>>) src(%73 : memref<1x32xf32, #tpu.memory_space<any>>) dst(%74 : memref<1x32xf32, #tpu.memory_space<vmem>>)
    %c5_i32_52 = arith.constant 5 : i32
    %c0_i32_53 = arith.constant 0 : i32
    %77 = tpu.memref_slice %arg2[%18, %c0_i32_53] : memref<16x32xf32, #tpu.memory_space<any>> -> memref<1x32xf32, #tpu.memory_space<any>>
    %c5_i32_54 = arith.constant 5 : i32
    %c0_i32_55 = arith.constant 0 : i32
    %78 = tpu.memref_slice %arg3[%c5_i32_54, %c0_i32_55] : memref<8x32xf32, #tpu.memory_space<vmem>> -> memref<1x32xf32, #tpu.memory_space<vmem>>
    %79 = tpu.memref_slice %arg4[%c5_i32_52] : memref<8x!tpu.dma_semaphore, #tpu.memory_space<semaphore_mem>> -> memref<1x!tpu.dma_semaphore, #tpu.memory_space<semaphore_mem>>
    %80 = tpu.memref_squeeze %79 : memref<1x!tpu.dma_semaphore, #tpu.memory_space<semaphore_mem>> -> memref<!tpu.dma_semaphore, #tpu.memory_space<semaphore_mem>>
    tpu.wait_dma2 semaphore(%80 : memref<!tpu.dma_semaphore, #tpu.memory_space<semaphore_mem>>) src(%77 : memref<1x32xf32, #tpu.memory_space<any>>) dst(%78 : memref<1x32xf32, #tpu.memory_space<vmem>>)
    %c6_i32_56 = arith.constant 6 : i32
    %c0_i32_57 = arith.constant 0 : i32
    %81 = tpu.memref_slice %arg2[%21, %c0_i32_57] : memref<16x32xf32, #tpu.memory_space<any>> -> memref<1x32xf32, #tpu.memory_space<any>>
    %c6_i32_58 = arith.constant 6 : i32
    %c0_i32_59 = arith.constant 0 : i32
    %82 = tpu.memref_slice %arg3[%c6_i32_58, %c0_i32_59] : memref<8x32xf32, #tpu.memory_space<vmem>> -> memref<1x32xf32, #tpu.memory_space<vmem>>
    %83 = tpu.memref_slice %arg4[%c6_i32_56] : memref<8x!tpu.dma_semaphore, #tpu.memory_space<semaphore_mem>> -> memref<1x!tpu.dma_semaphore, #tpu.memory_space<semaphore_mem>>
    %84 = tpu.memref_squeeze %83 : memref<1x!tpu.dma_semaphore, #tpu.memory_space<semaphore_mem>> -> memref<!tpu.dma_semaphore, #tpu.memory_space<semaphore_mem>>
    tpu.wait_dma2 semaphore(%84 : memref<!tpu.dma_semaphore, #tpu.memory_space<semaphore_mem>>) src(%81 : memref<1x32xf32, #tpu.memory_space<any>>) dst(%82 : memref<1x32xf32, #tpu.memory_space<vmem>>)
    %c7_i32_60 = arith.constant 7 : i32
    %c0_i32_61 = arith.constant 0 : i32
    %85 = tpu.memref_slice %arg2[%24, %c0_i32_61] : memref<16x32xf32, #tpu.memory_space<any>> -> memref<1x32xf32, #tpu.memory_space<any>>
    %c7_i32_62 = arith.constant 7 : i32
    %c0_i32_63 = arith.constant 0 : i32
    %86 = tpu.memref_slice %arg3[%c7_i32_62, %c0_i32_63] : memref<8x32xf32, #tpu.memory_space<vmem>> -> memref<1x32xf32, #tpu.memory_space<vmem>>
    %87 = tpu.memref_slice %arg4[%c7_i32_60] : memref<8x!tpu.dma_semaphore, #tpu.memory_space<semaphore_mem>> -> memref<1x!tpu.dma_semaphore, #tpu.memory_space<semaphore_mem>>
    %88 = tpu.memref_squeeze %87 : memref<1x!tpu.dma_semaphore, #tpu.memory_space<semaphore_mem>> -> memref<!tpu.dma_semaphore, #tpu.memory_space<semaphore_mem>>
    tpu.wait_dma2 semaphore(%88 : memref<!tpu.dma_semaphore, #tpu.memory_space<semaphore_mem>>) src(%85 : memref<1x32xf32, #tpu.memory_space<any>>) dst(%86 : memref<1x32xf32, #tpu.memory_space<vmem>>)
    return
  }
  func.func @transform_1(%arg0: i32, %arg1: memref<8xi32, #tpu.memory_space<smem>>) -> (i32, i32) {
    %c0_i32 = arith.constant 0 : i32
    %c0_i32_0 = arith.constant 0 : i32
    return %arg0, %c0_i32 : i32, i32
  }
}

</mosaic_0001>

<llo_original>
// kernel: tpu_custom_call.1
$region0: #{tpu_custom_call.1}
  #allocation0 [shape = 'u32[]', space=smem, size = 0x4, offset = 0x4, fixed_abs, tag = 'smem constant byte address 0x4 - core index']
  #allocation1 [shape = 'u32[144,128]{1,0:T(1,128)}', space=vmem, size = 0x12000, scoped, tag = 'internal scratch']
  #allocation2 [shape = 's32[8]{0}', space=sflag, size = 0x20, scoped, tag = 'scratch operand']
  #allocation3 [shape = 's32[1]{0}', space=sflag, size = 0x4, scoped, tag = 'scoped memory for tpu_custom_call.1']
  #allocation4 [shape = 'u8[512]{0}', space=smem, size = 0x200, scoped, tag = 'prefetched SMEM operand 0']
  #allocation7 [shape = 's32[]', space=sflag, size = 0x4, offset = 0, fixed_abs, tag = 'sflag constant byte address 0x0 - dummy sync flag']
  #allocation8 [shape = 's32[]', space=sflag, size = 0x4, offset = 0, fixed_abs, tag = 'sflag constant byte address 0x0 - dummy sync flag']
  #allocation9 [shape = 'u32[]', space=smem, size = 0x4, offset = 0x44, fixed_abs, tag = 'smem constant byte address 0x44 - assertion arg 0']
  #allocation10 [shape = 'u32[]', space=smem, size = 0x4, offset = 0x48, fixed_abs, tag = 'smem constant byte address 0x48 - assertion arg 1']
  #allocation11 [shape = 's32[]', space=sflag, size = 0x4, offset = 0, fixed_abs, tag = 'sflag constant byte address 0x0 - dummy sync flag']
  #allocation12 [shape = 's32[]', space=sflag, size = 0x4, offset = 0, fixed_abs, tag = 'sflag constant byte address 0x0 - dummy sync flag']
  #allocation13 [shape = 's32[]', space=sflag, size = 0x4, offset = 0, fixed_abs, tag = 'sflag constant byte address 0x0 - dummy sync flag']
  #allocation14 [shape = 's32[]', space=sflag, size = 0x4, offset = 0, fixed_abs, tag = 'sflag constant byte address 0x0 - dummy sync flag']
  #allocation15 [shape = 's32[]', space=sflag, size = 0x4, offset = 0, fixed_abs, tag = 'sflag constant byte address 0x0 - dummy sync flag']
  #allocation16 [shape = 's32[]', space=sflag, size = 0x4, offset = 0, fixed_abs, tag = 'sflag constant byte address 0x0 - dummy sync flag']
  #allocation17 [shape = 's32[]', space=sflag, size = 0x4, offset = 0, fixed_abs, tag = 'sflag constant byte address 0x0 - dummy sync flag']
  #allocation18 [shape = 's32[]', space=sflag, size = 0x4, offset = 0, fixed_abs, tag = 'sflag constant byte address 0x0 - dummy sync flag']
  #allocation19 [shape = 's32[]', space=sflag, size = 0x4, offset = 0, fixed_abs, tag = 'sflag constant byte address 0x0 - dummy sync flag']
  #allocation20 [shape = 's32[]', space=sflag, size = 0x4, offset = 0, fixed_abs, tag = 'sflag constant byte address 0x0 - dummy sync flag']
  #allocation21 [shape = 's32[]', space=sflag, size = 0x4, offset = 0, fixed_abs, tag = 'sflag constant byte address 0x0 - dummy sync flag']
  #allocation22 [shape = 's32[]', space=sflag, size = 0x4, offset = 0, fixed_abs, tag = 'sflag constant byte address 0x0 - dummy sync flag']
  #allocation23 [shape = 's32[]', space=sflag, size = 0x4, offset = 0, fixed_abs, tag = 'sflag constant byte address 0x0 - dummy sync flag']
  #allocation24 [shape = 's32[]', space=sflag, size = 0x4, offset = 0, fixed_abs, tag = 'sflag constant byte address 0x0 - dummy sync flag']
  %s0 = inlined_call_operand.hbm [shape: s32[8], index: 0, kind: input, shape index: {}]
  %s1 = inlined_call_operand.hbm [shape: f32[16,32], index: 1, kind: input, shape index: {}]
  %s2 = inlined_call_operand.hbm [shape: f32[8,32], index: 2, kind: output, shape index: {}]
  %s3 = sld [smem:[#allocation0]]
  $region42: #{tpu_custom_call.1} parent=0
    _
  %s5 = ssub.s32 1, %s3
  %s6 = scalar_select 0, %s5, %s3
  %8 = dma.hbm_to_smem %s0, 16, [#allocation4], [#allocation3]
  %9 = dma.done [#allocation3], 16
  %10 = sfence
  $region1: #{tpu_custom_call.1} parent=0
    #allocation5 [shape = 'u8[4096]{0}', space=vmem, size = 0x1000, scoped, tag = 'output window, operand 0, single buffered']
    #allocation6 [shape = 's32[1]{0}', space=sflag, size = 0x4, scoped, tag = 'scoped memory for tpu_custom_call.1']
    %11 = vsyncpa [#allocation6], 0
    %s12 = smul.u32 0, 8
    %s13 = sld [smem:[#allocation4 + %s12]]
    %s14 = sadd.s32 %s12, 1
    %s15 = sld [smem:[#allocation4 + %s14]]
    %s16 = sadd.s32 %s12, 2
    %s17 = sld [smem:[#allocation4 + %s16]]
    %s18 = sadd.s32 %s12, 3
    %s19 = sld [smem:[#allocation4 + %s18]]
    %s20 = sadd.s32 %s12, 4
    %s21 = sld [smem:[#allocation4 + %s20]]
    %s22 = sadd.s32 %s12, 5
    %s23 = sld [smem:[#allocation4 + %s22]]
    %s24 = sadd.s32 %s12, 6
    %s25 = sld [smem:[#allocation4 + %s24]]
    %s26 = sadd.s32 %s12, 7
    %s27 = sld [smem:[#allocation4 + %s26]]
    %s28 = smul.addr %s13, 16
    %s29 = scalar_lea.hbm %s1, %s28
    // Predicated region
    $region2: #{tpu_custom_call.1} parent=1 // pred_check
      _
    $region3: #{tpu_custom_call.1} parent=1 // pred_check_branch
      %31 = sbr.rel target = $region5
    $region4: #{tpu_custom_call.1} parent=1 // pred_region
      %32 = sst [smem:[#allocation9]] [#allocation8]
      %33 = sst [smem:[#allocation10]] [#allocation7]
    $region5: #{tpu_custom_call.1} parent=1 // pred_fallthru
      _
    %35 = shalt.err (0)
    %s37 = sshll.u32 [#allocation5], 4
    %s38 = int_to_ptr.vmem [resolvable:$true] %s37
    %40 = dma.hbm_to_vmem [thread:$0]  %s29, 16, %s38, [#allocation2]
    %s41 = smul.addr %s15, 16
    %s42 = scalar_lea.hbm %s1, %s41
    %s43 = scalar_lea.vmem [#allocation5], 1
    %s44 = scalar_lea.sflag [#allocation2], 1
    // Predicated region
    $region6: #{tpu_custom_call.1} parent=1 // pred_check
      _
    $region7: #{tpu_custom_call.1} parent=1 // pred_check_branch
      %46 = sbr.rel target = $region9
    $region8: #{tpu_custom_call.1} parent=1 // pred_region
      %47 = sst [smem:[#allocation9]] [#allocation12]
      %48 = sst [smem:[#allocation10]] [#allocation11]
    $region9: #{tpu_custom_call.1} parent=1 // pred_fallthru
      _
    %50 = shalt.err (0)
    %s52 = sshll.u32 %s43, 4
    %s53 = int_to_ptr.vmem [resolvable:$true] %s52
    %55 = dma.hbm_to_vmem [thread:$0]  %s42, 16, %s53, %s44
    %s56 = smul.addr %s17, 16
    %s57 = scalar_lea.hbm %s1, %s56
    %s58 = scalar_lea.vmem [#allocation5], 2
    %s59 = scalar_lea.sflag [#allocation2], 2
    // Predicated region
    $region10: #{tpu_custom_call.1} parent=1 // pred_check
      _
    $region11: #{tpu_custom_call.1} parent=1 // pred_check_branch
      %61 = sbr.rel target = $region13
    $region12: #{tpu_custom_call.1} parent=1 // pred_region
      %62 = sst [smem:[#allocation9]] [#allocation14]
      %63 = sst [smem:[#allocation10]] [#allocation13]
    $region13: #{tpu_custom_call.1} parent=1 // pred_fallthru
      _
    %65 = shalt.err (0)
    %s67 = sshll.u32 %s58, 4
    %s68 = int_to_ptr.vmem [resolvable:$true] %s67
    %70 = dma.hbm_to_vmem [thread:$0]  %s57, 16, %s68, %s59
    %s71 = smul.addr %s19, 16
    %s72 = scalar_lea.hbm %s1, %s71
    %s73 = scalar_lea.vmem [#allocation5], 3
    %s74 = scalar_lea.sflag [#allocation2], 3
    // Predicated region
    $region14: #{tpu_custom_call.1} parent=1 // pred_check
      _
    $region15: #{tpu_custom_call.1} parent=1 // pred_check_branch
      %76 = sbr.rel target = $region17
    $region16: #{tpu_custom_call.1} parent=1 // pred_region
      %77 = sst [smem:[#allocation9]] [#allocation16]
      %78 = sst [smem:[#allocation10]] [#allocation15]
    $region17: #{tpu_custom_call.1} parent=1 // pred_fallthru
      _
    %80 = shalt.err (0)
    %s82 = sshll.u32 %s73, 4
    %s83 = int_to_ptr.vmem [resolvable:$true] %s82
    %85 = dma.hbm_to_vmem [thread:$0]  %s72, 16, %s83, %s74
    %s86 = smul.addr %s21, 16
    %s87 = scalar_lea.hbm %s1, %s86
    %s88 = scalar_lea.vmem [#allocation5], 4
    %s89 = scalar_lea.sflag [#allocation2], 4
    // Predicated region
    $region18: #{tpu_custom_call.1} parent=1 // pred_check
      _
    $region19: #{tpu_custom_call.1} parent=1 // pred_check_branch
      %91 = sbr.rel target = $region21
    $region20: #{tpu_custom_call.1} parent=1 // pred_region
      %92 = sst [smem:[#allocation9]] [#allocation18]
      %93 = sst [smem:[#allocation10]] [#allocation17]
    $region21: #{tpu_custom_call.1} parent=1 // pred_fallthru
      _
    %95 = shalt.err (0)
    %s97 = sshll.u32 %s88, 4
    %s98 = int_to_ptr.vmem [resolvable:$true] %s97
    %100 = dma.hbm_to_vmem [thread:$0]  %s87, 16, %s98, %s89
    %s101 = smul.addr %s23, 16
    %s102 = scalar_lea.hbm %s1, %s101
    %s103 = scalar_lea.vmem [#allocation5], 5
    %s104 = scalar_lea.sflag [#allocation2], 5
    // Predicated region
    $region22: #{tpu_custom_call.1} parent=1 // pred_check
      _
    $region23: #{tpu_custom_call.1} parent=1 // pred_check_branch
      %106 = sbr.rel target = $region25
    $region24: #{tpu_custom_call.1} parent=1 // pred_region
      %107 = sst [smem:[#allocation9]] [#allocation20]
      %108 = sst [smem:[#allocation10]] [#allocation19]
    $region25: #{tpu_custom_call.1} parent=1 // pred_fallthru
      _
    %110 = shalt.err (0)
    %s112 = sshll.u32 %s103, 4
    %s113 = int_to_ptr.vmem [resolvable:$true] %s112
    %115 = dma.hbm_to_vmem [thread:$0]  %s102, 16, %s113, %s104
    %s116 = smul.addr %s25, 16
    %s117 = scalar_lea.hbm %s1, %s116
    %s118 = scalar_lea.vmem [#allocation5], 6
    %s119 = scalar_lea.sflag [#allocation2], 6
    // Predicated region
    $region26: #{tpu_custom_call.1} parent=1 // pred_check
      _
    $region27: #{tpu_custom_call.1} parent=1 // pred_check_branch
      %121 = sbr.rel target = $region29
    $region28: #{tpu_custom_call.1} parent=1 // pred_region
      %122 = sst [smem:[#allocation9]] [#allocation22]
      %123 = sst [smem:[#allocation10]] [#allocation21]
    $region29: #{tpu_custom_call.1} parent=1 // pred_fallthru
      _
    %125 = shalt.err (0)
    %s127 = sshll.u32 %s118, 4
    %s128 = int_to_ptr.vmem [resolvable:$true] %s127
    %130 = dma.hbm_to_vmem [thread:$0]  %s117, 16, %s128, %s119
    %s131 = smul.addr %s27, 16
    %s132 = scalar_lea.hbm %s1, %s131
    %s133 = scalar_lea.vmem [#allocation5], 7
    %s134 = scalar_lea.sflag [#allocation2], 7
    // Predicated region
    $region30: #{tpu_custom_call.1} parent=1 // pred_check
      _
    $region31: #{tpu_custom_call.1} parent=1 // pred_check_branch
      %136 = sbr.rel target = $region33
    $region32: #{tpu_custom_call.1} parent=1 // pred_region
      %137 = sst [smem:[#allocation9]] [#allocation24]
      %138 = sst [smem:[#allocation10]] [#allocation23]
    $region33: #{tpu_custom_call.1} parent=1 // pred_fallthru
      _
    %140 = shalt.err (0)
    %s142 = sshll.u32 %s133, 4
    %s143 = int_to_ptr.vmem [resolvable:$true] %s142
    %145 = dma.hbm_to_vmem [thread:$0]  %s132, 16, %s143, %s134
    %s146 = smul.u32 1, 1
    %s147 = sshll.u32 %s146, 4
    %148 = dma.done [#allocation2], %s147
    %s149 = sshll.u32 %s146, 4
    %150 = dma.done %s44, %s149
    %s151 = sshll.u32 %s146, 4
    %152 = dma.done %s59, %s151
    %s153 = sshll.u32 %s146, 4
    %154 = dma.done %s74, %s153
    %s155 = sshll.u32 %s146, 4
    %156 = dma.done %s89, %s155
    %s157 = sshll.u32 %s146, 4
    %158 = dma.done %s104, %s157
    %s159 = sshll.u32 %s146, 4
    %160 = dma.done %s119, %s159
    %s161 = sshll.u32 %s146, 4
    %162 = dma.done %s134, %s161
    // Predicated region
    $region34: #{tpu_custom_call.1} parent=1 // pred_check
      _
    $region35: #{tpu_custom_call.1} parent=1 // pred_check_branch
      %164 = sbr.rel (0) target = $region37
    $region36: #{tpu_custom_call.1} parent=1 // pred_region
      %s166 = ssub.s32 128, 128
      %167 = vsyncadd [#allocation6], %s166
      %s169 = sshll.u32 [#allocation5], 4
      %s170 = int_to_ptr.vmem [resolvable:$true] %s169
      %172 = dma.vmem_to_hbm [thread:$0]  %s170, 128, %s2, [#allocation6]
    $region37: #{tpu_custom_call.1} parent=1 // pred_fallthru
      _
    // Predicated region
    $region38: #{tpu_custom_call.1} parent=1 // pred_check
      _
    $region39: #{tpu_custom_call.1} parent=1 // pred_check_branch
      %174 = sbr.rel (0) target = $region41
    $region40: #{tpu_custom_call.1} parent=1 // pred_region
      %175 = dma.done [#allocation6], 128
    $region41: #{tpu_custom_call.1} parent=1 // pred_fallthru
      _
    %176 = vsyncpa [#allocation6], 1
  %177 = vsyncmov [#allocation2]
  %s178 = vpop.sfrf %177
  %p179 = scmp.eq.s32.totalorder %s178, 0
  %p180 = pneg %p179
  %182 = shalt.err (%p180)
  %s183 = scalar_lea.sflag [#allocation2], 1
  %184 = vsyncmov %s183
  %s185 = vpop.sfrf %184
  %p186 = scmp.eq.s32.totalorder %s185, 0
  %p187 = pneg %p186
  %189 = shalt.err (%p187)
  %s190 = scalar_lea.sflag [#allocation2], 2
  %191 = vsyncmov %s190
  %s192 = vpop.sfrf %191
  %p193 = scmp.eq.s32.totalorder %s192, 0
  %p194 = pneg %p193
  %196 = shalt.err (%p194)
  %s197 = scalar_lea.sflag [#allocation2], 3
  %198 = vsyncmov %s197
  %s199 = vpop.sfrf %198
  %p200 = scmp.eq.s32.totalorder %s199, 0
  %p201 = pneg %p200
  %203 = shalt.err (%p201)
  %s204 = scalar_lea.sflag [#allocation2], 4
  %205 = vsyncmov %s204
  %s206 = vpop.sfrf %205
  %p207 = scmp.eq.s32.totalorder %s206, 0
  %p208 = pneg %p207
  %210 = shalt.err (%p208)
  %s211 = scalar_lea.sflag [#allocation2], 5
  %212 = vsyncmov %s211
  %s213 = vpop.sfrf %212
  %p214 = scmp.eq.s32.totalorder %s213, 0
  %p215 = pneg %p214
  %217 = shalt.err (%p215)
  %s218 = scalar_lea.sflag [#allocation2], 6
  %219 = vsyncmov %s218
  %s220 = vpop.sfrf %219
  %p221 = scmp.eq.s32.totalorder %s220, 0
  %p222 = pneg %p221
  %224 = shalt.err (%p222)
  %s225 = scalar_lea.sflag [#allocation2], 7
  %226 = vsyncmov %s225
  %s227 = vpop.sfrf %226
  %p228 = scmp.eq.s32.totalorder %s227, 0
  %p229 = pneg %p228
  %231 = shalt.err (%p229)

</llo_original>
